<compile_context>
chip_gen: v7x
topology: tpu7x:2x2x1
jax: 0.10.0
libtpu: 0.0.40
codegen_flags: <defaults>
</compile_context>

<pallas_src>
import jax
import jax.numpy as jnp
from jax.experimental import pallas as pl
from jax.experimental.pallas import tpu as pltpu

INPUT_SIZE = 784
HIDDEN_SIZE = 100
NUM_CLASSES = 10
HIDDEN_PAD = 128      # lane-dense hidden width (zero-padded columns are inert)


def mlp_kernel(x_ref, w1_ref, b1_ref, w2_ref, b2_ref, o_ref):
    # In-kernel bf16 cast of the activations (no extra HBM pass in the wrapper);
    # MXU-native bf16 x bf16 -> f32 accumulate, bias + ReLU on the VPU.
    x = x_ref[...].astype(jnp.bfloat16)
    h = jnp.dot(x, w1_ref[...], preferred_element_type=jnp.float32)
    h = jnp.maximum(h + b1_ref[...], 0.0)                  # (TB, 128) f32
    # Second matmul is tiny (K=128, N=10) and fully hidden under DMA slack:
    # keep it in f32 to recover accuracy for free.
    out = jnp.dot(h, w2_ref[...], preferred_element_type=jnp.float32)
    o_ref[...] = (out + b2_ref[...]).astype(o_ref.dtype)   # (TB, 10) store


def prepare_params(w1, b1, w2, b2):
    """Pad the hidden dim to 128 lanes; W1 in bf16, everything else f32.

    w1: (784, 100), b1: (100,), w2: (100, 10), b2: (10,)  [in, out] layout.
    Padded rows/columns are zero, so results are unaffected by the padding.
    """
    w1_p = jnp.zeros((INPUT_SIZE, HIDDEN_PAD), jnp.bfloat16)
    w1_p = w1_p.at[:, :HIDDEN_SIZE].set(w1.astype(jnp.bfloat16))
    b1_p = jnp.zeros((1, HIDDEN_PAD), jnp.float32).at[:, :HIDDEN_SIZE].set(b1)
    w2_p = jnp.zeros((HIDDEN_PAD, NUM_CLASSES), jnp.float32)
    w2_p = w2_p.at[:HIDDEN_SIZE, :].set(w2.astype(jnp.float32))
    b2_p = b2.astype(jnp.float32).reshape(1, NUM_CLASSES)
    return w1_p, b1_p, w2_p, b2_p


def _choose_batch_tile(B, block_b):
    """Pick a batch tile: big enough to hit the HBM roofline, but >= 2 grid
    steps when the batch allows it so both v7x TensorCores get work."""
    if B <= 16:
        return B                       # tiny batch: one tile equal to the full dim
    tb = min(block_b, B)
    if tb >= B:
        # Split into two tiles (rounded up to a multiple of 8 sublanes).
        tb = -(-((B + 1) // 2) // 8) * 8
    return min(tb, B)


def neural_net_forward(x, params, *, block_b=1024):
    """x: (B, 784) float; params: output of prepare_params. Returns (B, 10) f32.

    NOTE: the ragged last batch block reads out-of-bounds rows as undefined
    data; this is safe because every op is row-local and Pallas masks the
    out-of-bounds rows on writeback.  Do not add cross-batch reductions inside
    the kernel without reinstating explicit masking.
    """
    w1_p, b1_p, w2_p, b2_p = params
    B = x.shape[0]
    tb = _choose_batch_tile(B, block_b)
    n_blocks = pl.cdiv(B, tb)

    return pl.pallas_call(
        mlp_kernel,
        out_shape=jax.ShapeDtypeStruct((B, NUM_CLASSES), jnp.float32),
        grid=(n_blocks,),
        in_specs=[
            pl.BlockSpec((tb, INPUT_SIZE), lambda i: (i, 0)),            # x: tiled over batch
            pl.BlockSpec((INPUT_SIZE, HIDDEN_PAD), lambda i: (0, 0)),    # W1: resident
            pl.BlockSpec((1, HIDDEN_PAD), lambda i: (0, 0)),             # b1: resident
            pl.BlockSpec((HIDDEN_PAD, NUM_CLASSES), lambda i: (0, 0)),   # W2: resident
            pl.BlockSpec((1, NUM_CLASSES), lambda i: (0, 0)),            # b2: resident
        ],
        out_specs=pl.BlockSpec((tb, NUM_CLASSES), lambda i: (i, 0)),
        compiler_params=pltpu.CompilerParams(
            dimension_semantics=("parallel",),   # shard batch tiles across TCs (v7x)
            vmem_limit_bytes=32 << 20,           # v7x-safe; per-step footprint ~7 MiB at tb=1024
        ),
    )(x, w1_p, b1_p, w2_p, b2_p)


def init_params(key):
    """Deterministic init mimicking nn.Linear: U(-1/sqrt(fan_in), 1/sqrt(fan_in))."""
    k1, k2, k3, k4 = jax.random.split(key, 4)
    bound1 = 1.0 / jnp.sqrt(INPUT_SIZE)
    bound2 = 1.0 / jnp.sqrt(HIDDEN_SIZE)
    # Stored directly in (in, out) layout (transpose of PyTorch's (out, in)).
    w1 = jax.random.uniform(k1, (INPUT_SIZE, HIDDEN_SIZE), jnp.float32, -bound1, bound1)
    b1 = jax.random.uniform(k2, (HIDDEN_SIZE,), jnp.float32, -bound1, bound1)
    w2 = jax.random.uniform(k3, (HIDDEN_SIZE, NUM_CLASSES), jnp.float32, -bound2, bound2)
    b2 = jax.random.uniform(k4, (NUM_CLASSES,), jnp.float32, -bound2, bound2)
    return w1, b1, w2, b2


if __name__ == "__main__":
    key = jax.random.PRNGKey(0)
    kx, kp = jax.random.split(key)
    batch = 8
    x = jax.random.normal(kx, (batch, INPUT_SIZE), jnp.float32)
    w1, b1, w2, b2 = init_params(kp)
    params = prepare_params(w1, b1, w2, b2)

    out = neural_net_forward(x, params)
    jax.block_until_ready(out)

    # Pure-JAX f32 reference check (bf16 first-layer operands -> loosened tolerance).
    ref = jnp.maximum(x @ w1 + b1, 0.0) @ w2 + b2
    assert out.shape == (batch, NUM_CLASSES)
    assert jnp.allclose(out, ref, atol=5e-2, rtol=5e-2), (
        float(jnp.max(jnp.abs(out - ref))))

    print("KERNEL_OK")
</pallas_src>

<mosaic_0001>
module attributes {stable_mosaic.version = 11 : i64} {
  func.func @mlp_kernel(%arg0: i32, %arg1: memref<8x784xf32, #tpu.memory_space<vmem>>, %arg2: memref<784x128xbf16, #tpu.memory_space<vmem>>, %arg3: memref<1x128xf32, #tpu.memory_space<vmem>>, %arg4: memref<128x10xf32, #tpu.memory_space<vmem>>, %arg5: memref<1x10xf32, #tpu.memory_space<vmem>>, %arg6: memref<8x10xf32, #tpu.memory_space<vmem>>) attributes {dimension_semantics = [#tpu.dimension_semantics<parallel>], iteration_bounds = array<i64: 1>, scalar_prefetch = 0 : i64, scratch_operands = 0 : i64, tpu.core_type = #tpu.core_type<tc>, window_params = [{transform_indices = @transform_0, window_bounds = array<i64: 8, 784>}, {pipeline_mode = #tpu.pipeline_mode<synchronous>, transform_indices = @transform_1, window_bounds = array<i64: 784, 128>}, {pipeline_mode = #tpu.pipeline_mode<synchronous>, transform_indices = @transform_2, window_bounds = array<i64: 1, 128>}, {pipeline_mode = #tpu.pipeline_mode<synchronous>, transform_indices = @transform_3, window_bounds = array<i64: 128, 10>}, {pipeline_mode = #tpu.pipeline_mode<synchronous>, transform_indices = @transform_4, window_bounds = array<i64: 1, 10>}, {transform_indices = @transform_5, window_bounds = array<i64: 8, 10>}]} {
    %c0 = arith.constant 0 : index
    %c0_0 = arith.constant 0 : index
    %0 = vector.load %arg1[%c0, %c0_0] : memref<8x784xf32, #tpu.memory_space<vmem>>, vector<8x784xf32>
    %1 = arith.truncf %0 : vector<8x784xf32> to vector<8x784xbf16>
    %c0_1 = arith.constant 0 : index
    %c0_2 = arith.constant 0 : index
    %2 = vector.load %arg2[%c0_1, %c0_2] : memref<784x128xbf16, #tpu.memory_space<vmem>>, vector<784x128xbf16>
    %cst = arith.constant dense<0.000000e+00> : vector<8x128xf32>
    %3 = tpu.matmul %1, %2, %cst {dimension_numbers = #tpu.dot_dimension_numbers<[1], [0], [0], [1], [0, 0, 1, 1], [], []>} : vector<8x784xbf16>, vector<784x128xbf16>, vector<8x128xf32> -> vector<8x128xf32>
    %c0_3 = arith.constant 0 : index
    %c0_4 = arith.constant 0 : index
    %4 = vector.load %arg3[%c0_3, %c0_4] : memref<1x128xf32, #tpu.memory_space<vmem>>, vector<1x128xf32>
    %5 = vector.broadcast %4 : vector<1x128xf32> to vector<8x128xf32>
    %6 = arith.addf %3, %5 : vector<8x128xf32>
    %cst_5 = arith.constant 0.000000e+00 : f32
    %7 = vector.broadcast %cst_5 : f32 to vector<8x128xf32>
    %8 = arith.maximumf %6, %7 : vector<8x128xf32>
    %c0_6 = arith.constant 0 : index
    %c0_7 = arith.constant 0 : index
    %9 = vector.load %arg4[%c0_6, %c0_7] : memref<128x10xf32, #tpu.memory_space<vmem>>, vector<128x10xf32>
    %cst_8 = arith.constant dense<0.000000e+00> : vector<8x10xf32>
    %10 = tpu.matmul %8, %9, %cst_8 {dimension_numbers = #tpu.dot_dimension_numbers<[1], [0], [0], [1], [0, 0, 1, 1], [], []>} : vector<8x128xf32>, vector<128x10xf32>, vector<8x10xf32> -> vector<8x10xf32>
    %c0_9 = arith.constant 0 : index
    %c0_10 = arith.constant 0 : index
    %11 = vector.load %arg5[%c0_9, %c0_10] : memref<1x10xf32, #tpu.memory_space<vmem>>, vector<1x10xf32>
    %12 = vector.broadcast %11 : vector<1x10xf32> to vector<8x10xf32>
    %13 = arith.addf %10, %12 : vector<8x10xf32>
    %c0_11 = arith.constant 0 : index
    %c0_12 = arith.constant 0 : index
    %14 = vector.load %arg6[%c0_11, %c0_12] : memref<8x10xf32, #tpu.memory_space<vmem>>, vector<8x10xf32>
    tpu.vector_store %arg6[%c0_11, %c0_12], %13 {strides = array<i32>} : memref<8x10xf32, #tpu.memory_space<vmem>>, vector<8x10xf32>,
    return
  }
  func.func @transform_0(%arg0: i32) -> (i32, i32) {
    %c0_i32 = arith.constant 0 : i32
    %c0_i32_0 = arith.constant 0 : i32
    return %arg0, %c0_i32 : i32, i32
  }
  func.func @transform_1(%arg0: i32) -> (i32, i32) {
    %c0_i32 = arith.constant 0 : i32
    %c0_i32_0 = arith.constant 0 : i32
    %c0_i32_1 = arith.constant 0 : i32
    return %c0_i32, %c0_i32_0 : i32, i32
  }
  func.func @transform_2(%arg0: i32) -> (i32, i32) {
    %c0_i32 = arith.constant 0 : i32
    %c0_i32_0 = arith.constant 0 : i32
    %c0_i32_1 = arith.constant 0 : i32
    return %c0_i32, %c0_i32_0 : i32, i32
  }
  func.func @transform_3(%arg0: i32) -> (i32, i32) {
    %c0_i32 = arith.constant 0 : i32
    %c0_i32_0 = arith.constant 0 : i32
    %c0_i32_1 = arith.constant 0 : i32
    return %c0_i32, %c0_i32_0 : i32, i32
  }
  func.func @transform_4(%arg0: i32) -> (i32, i32) {
    %c0_i32 = arith.constant 0 : i32
    %c0_i32_0 = arith.constant 0 : i32
    %c0_i32_1 = arith.constant 0 : i32
    return %c0_i32, %c0_i32_0 : i32, i32
  }
  func.func @transform_5(%arg0: i32) -> (i32, i32) {
    %c0_i32 = arith.constant 0 : i32
    %c0_i32_0 = arith.constant 0 : i32
    return %arg0, %c0_i32 : i32, i32
  }
}

</mosaic_0001>

<llo_original>
// kernel: tpu_custom_call.1
$region0: #{tpu_custom_call.1}
  #allocation0 [shape = 'u32[]', space=smem, size = 0x4, offset = 0x4, fixed_abs, tag = 'smem constant byte address 0x4 - core index']
  #allocation1 [shape = 'u32[144,128]{1,0:T(1,128)}', space=vmem, size = 0x12000, scoped, tag = 'internal scratch']
  %s0 = inlined_call_operand.vmem [shape: f32[8,784], index: 0, kind: input, shape index: {}]
  %s1 = inlined_call_operand.hbm [shape: bf16[784,128], index: 1, kind: input, shape index: {}]
  %s2 = inlined_call_operand.vmem [shape: f32[1,128], index: 2, kind: input, shape index: {}]
  %s3 = inlined_call_operand.vmem [shape: f32[128,10], index: 3, kind: input, shape index: {}]
  %s4 = inlined_call_operand.vmem [shape: f32[1,10], index: 4, kind: input, shape index: {}]
  %s5 = inlined_call_operand.hbm [shape: f32[8,10], index: 5, kind: output, shape index: {}]
  %s6 = sld [smem:[#allocation0]]
  $region34: #{tpu_custom_call.1} parent=0
    _
  %s8 = ssub.s32 1, %s6
  %s9 = scalar_select 0, %s8, %s6
  $region1: #{tpu_custom_call.1} parent=0
    #allocation2 [shape = 'u8[200704]{0}', space=vmem, size = 0x31000, scoped, tag = 'input window, operand 1, single buffered']
    #allocation3 [shape = 's32[1]{0}', space=sflag, size = 0x4, scoped, tag = 'scoped memory for tpu_custom_call.1']
    #allocation4 [shape = 's32[1]{0}', space=sflag, size = 0x4, scoped, tag = 'scoped memory for tpu_custom_call.1']
    #allocation5 [shape = 'u8[4096]{0}', space=vmem, size = 0x1000, scoped, tag = 'output window, operand 0, single buffered']
    %10 = vsyncpa [#allocation3], 0
    %11 = vsyncpa [#allocation4], 0
    // Predicated region
    $region2: #{tpu_custom_call.1} parent=1 // pred_check
      _
    $region3: #{tpu_custom_call.1} parent=1 // pred_check_branch
      %13 = sbr.rel (0) target = $region5
    $region4: #{tpu_custom_call.1} parent=1 // pred_region
      _
    $region5: #{tpu_custom_call.1} parent=1 // pred_fallthru
      _
    // Predicated region
    $region6: #{tpu_custom_call.1} parent=1 // pred_check
      _
    $region7: #{tpu_custom_call.1} parent=1 // pred_check_branch
      %15 = sbr.rel (0) target = $region9
    $region8: #{tpu_custom_call.1} parent=1 // pred_region
      %s17 = ssub.s32 6272, 6272
      %18 = vsyncadd [#allocation3], %s17
      %s19 = sshll.u32 [#allocation2], 4
      %s20 = int_to_ptr.vmem [resolvable:$true] %s19
      %25 = dma.hbm_to_vmem [thread:$0]  %s1, 6272, %s20, [#allocation3], 64, 64, 4
    $region9: #{tpu_custom_call.1} parent=1 // pred_fallthru
      _
    // Predicated region
    $region10: #{tpu_custom_call.1} parent=1 // pred_check
      _
    $region11: #{tpu_custom_call.1} parent=1 // pred_check_branch
      %27 = sbr.rel (0) target = $region13
    $region12: #{tpu_custom_call.1} parent=1 // pred_region
      _
    $region13: #{tpu_custom_call.1} parent=1 // pred_fallthru
      _
    // Predicated region
    $region14: #{tpu_custom_call.1} parent=1 // pred_check
      _
    $region15: #{tpu_custom_call.1} parent=1 // pred_check_branch
      %29 = sbr.rel (0) target = $region17
    $region16: #{tpu_custom_call.1} parent=1 // pred_region
      _
    $region17: #{tpu_custom_call.1} parent=1 // pred_fallthru
      _
    // Predicated region
    $region18: #{tpu_custom_call.1} parent=1 // pred_check
      _
    $region19: #{tpu_custom_call.1} parent=1 // pred_check_branch
      %31 = sbr.rel (0) target = $region21
    $region20: #{tpu_custom_call.1} parent=1 // pred_region
      _
    $region21: #{tpu_custom_call.1} parent=1 // pred_fallthru
      _
    // Predicated region
    $region22: #{tpu_custom_call.1} parent=1 // pred_check
      _
    $region23: #{tpu_custom_call.1} parent=1 // pred_check_branch
      %33 = sbr.rel (0) target = $region25
    $region24: #{tpu_custom_call.1} parent=1 // pred_region
      %34 = dma.done [#allocation3], 6272
    $region25: #{tpu_custom_call.1} parent=1 // pred_fallthru
      _
    %v36 = vld [vmem:[%s0] sm:$0xff]
    %v37 = vld [vmem:[%s0 + $0x8] sm:$0xff]
    %v38 = vld [vmem:[%s0 + $0x10] sm:$0xff]
    %v39 = vld [vmem:[%s0 + $0x18] sm:$0xff]
    %v40 = vld [vmem:[%s0 + $0x20] sm:$0xff]
    %v41 = vld [vmem:[%s0 + $0x28] sm:$0xff]
    %v42 = vld [vmem:[%s0 + $0x30] sm:$0xff]
    %v43 = vpack.c.bf16 %v36, %v36
    %v44 = vpack.c.bf16 %v37, %v37
    %v45 = vpack.c.bf16 %v38, %v38
    %v46 = vpack.c.bf16 %v39, %v39
    %v47 = vpack.c.bf16 %v40, %v40
    %v48 = vpack.c.bf16 %v41, %v41
    %v49 = vpack.c.bf16 %v42, %v42
    %v50 = vld [vmem:[#allocation2] sm:$0xf]
    %v51 = vld [vmem:[#allocation2 + $0x4] sm:$0xf]
    %v52 = vld [vmem:[#allocation2 + $0x8] sm:$0xf]
    %v53 = vld [vmem:[#allocation2 + $0xc] sm:$0xf]
    %v54 = vld [vmem:[#allocation2 + $0x10] sm:$0xf]
    %v55 = vld [vmem:[#allocation2 + $0x14] sm:$0xf]
    %v56 = vld [vmem:[#allocation2 + $0x18] sm:$0xf]
    %v57 = vld [vmem:[#allocation2 + $0x1c] sm:$0xf]
    %v58 = vld [vmem:[#allocation2 + $0x20] sm:$0xf]
    %v59 = vld [vmem:[#allocation2 + $0x24] sm:$0xf]
    %v60 = vld [vmem:[#allocation2 + $0x28] sm:$0xf]
    %v61 = vld [vmem:[#allocation2 + $0x2c] sm:$0xf]
    %v62 = vld [vmem:[#allocation2 + $0x30] sm:$0xf]
    %v63 = vld [vmem:[#allocation2 + $0x34] sm:$0xf]
    %v64 = vld [vmem:[#allocation2 + $0x38] sm:$0xf]
    %v65 = vld [vmem:[#allocation2 + $0x3c] sm:$0xf]
    %v66 = vld [vmem:[#allocation2 + $0x40] sm:$0xf]
    %v67 = vld [vmem:[#allocation2 + $0x44] sm:$0xf]
    %v68 = vld [vmem:[#allocation2 + $0x48] sm:$0xf]
    %v69 = vld [vmem:[#allocation2 + $0x4c] sm:$0xf]
    %v70 = vld [vmem:[#allocation2 + $0x50] sm:$0xf]
    %v71 = vld [vmem:[#allocation2 + $0x54] sm:$0xf]
    %v72 = vld [vmem:[#allocation2 + $0x58] sm:$0xf]
    %v73 = vld [vmem:[#allocation2 + $0x5c] sm:$0xf]
    %v74 = vld [vmem:[#allocation2 + $0x60] sm:$0xf]
    %v75 = vld [vmem:[#allocation2 + $0x64] sm:$0xf]
    %v76 = vld [vmem:[#allocation2 + $0x68] sm:$0xf]
    %v77 = vld [vmem:[#allocation2 + $0x6c] sm:$0xf]
    %v78 = vld [vmem:[#allocation2 + $0x70] sm:$0xf]
    %v79 = vld [vmem:[#allocation2 + $0x74] sm:$0xf]
    %v80 = vld [vmem:[#allocation2 + $0x78] sm:$0xf]
    %v81 = vld [vmem:[#allocation2 + $0x7c] sm:$0xf]
    %v82 = vld [vmem:[#allocation2 + $0x80] sm:$0xf]
    %v83 = vld [vmem:[#allocation2 + $0x84] sm:$0xf]
    %v84 = vld [vmem:[#allocation2 + $0x88] sm:$0xf]
    %v85 = vld [vmem:[#allocation2 + $0x8c] sm:$0xf]
    %v86 = vld [vmem:[#allocation2 + $0x90] sm:$0xf]
    %v87 = vld [vmem:[#allocation2 + $0x94] sm:$0xf]
    %v88 = vld [vmem:[#allocation2 + $0x98] sm:$0xf]
    %v89 = vld [vmem:[#allocation2 + $0x9c] sm:$0xf]
    %v90 = vld [vmem:[#allocation2 + $0xa0] sm:$0xf]
    %v91 = vld [vmem:[#allocation2 + $0xa4] sm:$0xf]
    %v92 = vld [vmem:[#allocation2 + $0xa8] sm:$0xf]
    %v93 = vld [vmem:[#allocation2 + $0xac] sm:$0xf]
    %v94 = vld [vmem:[#allocation2 + $0xb0] sm:$0xf]
    %v95 = vld [vmem:[#allocation2 + $0xb4] sm:$0xf]
    %v96 = vld [vmem:[#allocation2 + $0xb8] sm:$0xf]
    %v97 = vld [vmem:[#allocation2 + $0xbc] sm:$0xf]
    %v98 = vld [vmem:[#allocation2 + $0xc0] sm:$0xf]
    %v99 = vld [vmem:[#allocation2 + $0xc4] sm:$0xf]
    %v100 = vld [vmem:[#allocation2 + $0xc8] sm:$0xf]
    %v101 = vld [vmem:[#allocation2 + $0xcc] sm:$0xf]
    %v102 = vld [vmem:[#allocation2 + $0xd0] sm:$0xf]
    %v103 = vld [vmem:[#allocation2 + $0xd4] sm:$0xf]
    %v104 = vld [vmem:[#allocation2 + $0xd8] sm:$0xf]
    %v105 = vld [vmem:[#allocation2 + $0xdc] sm:$0xf]
    %v106 = vld [vmem:[#allocation2 + $0xe0] sm:$0xf]
    %v107 = vld [vmem:[#allocation2 + $0xe4] sm:$0xf]
    %v108 = vld [vmem:[#allocation2 + $0xe8] sm:$0xf]
    %v109 = vld [vmem:[#allocation2 + $0xec] sm:$0xf]
    %v110 = vld [vmem:[#allocation2 + $0xf0] sm:$0xf]
    %v111 = vld [vmem:[#allocation2 + $0xf4] sm:$0xf]
    %v112 = vld [vmem:[#allocation2 + $0xf8] sm:$0xf]
    %v113 = vld [vmem:[#allocation2 + $0xfc] sm:$0xf]
    %v114 = vld [vmem:[#allocation2 + $0x100] sm:$0xf]
    %v115 = vld [vmem:[#allocation2 + $0x104] sm:$0xf]
    %v116 = vld [vmem:[#allocation2 + $0x108] sm:$0xf]
    %v117 = vld [vmem:[#allocation2 + $0x10c] sm:$0xf]
    %v118 = vld [vmem:[#allocation2 + $0x110] sm:$0xf]
    %v119 = vld [vmem:[#allocation2 + $0x114] sm:$0xf]
    %v120 = vld [vmem:[#allocation2 + $0x118] sm:$0xf]
    %v121 = vld [vmem:[#allocation2 + $0x11c] sm:$0xf]
    %v122 = vld [vmem:[#allocation2 + $0x120] sm:$0xf]
    %v123 = vld [vmem:[#allocation2 + $0x124] sm:$0xf]
    %v124 = vld [vmem:[#allocation2 + $0x128] sm:$0xf]
    %v125 = vld [vmem:[#allocation2 + $0x12c] sm:$0xf]
    %v126 = vld [vmem:[#allocation2 + $0x130] sm:$0xf]
    %v127 = vld [vmem:[#allocation2 + $0x134] sm:$0xf]
    %v128 = vld [vmem:[#allocation2 + $0x138] sm:$0xf]
    %v129 = vld [vmem:[#allocation2 + $0x13c] sm:$0xf]
    %v130 = vld [vmem:[#allocation2 + $0x140] sm:$0xf]
    %v131 = vld [vmem:[#allocation2 + $0x144] sm:$0xf]
    %v132 = vld [vmem:[#allocation2 + $0x148] sm:$0xf]
    %v133 = vld [vmem:[#allocation2 + $0x14c] sm:$0xf]
    %v134 = vld [vmem:[#allocation2 + $0x150] sm:$0xf]
    %v135 = vld [vmem:[#allocation2 + $0x154] sm:$0xf]
    %v136 = vld [vmem:[#allocation2 + $0x158] sm:$0xf]
    %v137 = vld [vmem:[#allocation2 + $0x15c] sm:$0xf]
    %v138 = vld [vmem:[#allocation2 + $0x160] sm:$0xf]
    %v139 = vld [vmem:[#allocation2 + $0x164] sm:$0xf]
    %v140 = vld [vmem:[#allocation2 + $0x168] sm:$0xf]
    %v141 = vld [vmem:[#allocation2 + $0x16c] sm:$0xf]
    %v142 = vld [vmem:[#allocation2 + $0x170] sm:$0xf]
    %v143 = vld [vmem:[#allocation2 + $0x174] sm:$0xf]
    %v144 = vld [vmem:[#allocation2 + $0x178] sm:$0xf]
    %v145 = vld [vmem:[#allocation2 + $0x17c] sm:$0xf]
    %v146 = vld [vmem:[#allocation2 + $0x180] sm:$0xf]
    %v147 = vld [vmem:[#allocation2 + $0x184] sm:$0xf]
    %v148 = vld [vmem:[%s2] sm:$0x1]
    %v150 = vlaneseq
    %v151 = vshrl.u32 %v150, 7
    %v152 = vsub.s32 0, %v151
    %v153 = vrot.slane %v148, %v152
    %v253 = vunpack.c.l.b16 %v50
    %v254 = vunpack.c.l.b16 %v51
    %v255 = vunpack.c.l.b16 %v52
    %v256 = vunpack.c.l.b16 %v53
    %v257 = vunpack.c.l.b16 %v54
    %v258 = vunpack.c.l.b16 %v55
    %v259 = vunpack.c.l.b16 %v56
    %v260 = vunpack.c.l.b16 %v57
    %v261 = vunpack.c.l.b16 %v58
    %v262 = vunpack.c.l.b16 %v59
    %v263 = vunpack.c.l.b16 %v60
    %v264 = vunpack.c.l.b16 %v61
    %v265 = vunpack.c.l.b16 %v62
    %v266 = vunpack.c.l.b16 %v63
    %v267 = vunpack.c.l.b16 %v64
    %v268 = vunpack.c.l.b16 %v65
    %v269 = vunpack.c.l.b16 %v66
    %v270 = vunpack.c.l.b16 %v67
    %v271 = vunpack.c.l.b16 %v68
    %v272 = vunpack.c.l.b16 %v69
    %v273 = vunpack.c.l.b16 %v70
    %v274 = vunpack.c.l.b16 %v71
    %v275 = vunpack.c.l.b16 %v72
    %v276 = vunpack.c.l.b16 %v73
    %v277 = vunpack.c.l.b16 %v74
    %v278 = vunpack.c.l.b16 %v75
    %v279 = vunpack.c.l.b16 %v76
    %v280 = vunpack.c.l.b16 %v77
    %v281 = vunpack.c.l.b16 %v78
    %v282 = vunpack.c.l.b16 %v79
    %v283 = vunpack.c.l.b16 %v80
    %v284 = vunpack.c.l.b16 %v81
    %v285 = vunpack.c.l.b16 %v82
    %v286 = vunpack.c.l.b16 %v83
    %v287 = vunpack.c.l.b16 %v84
    %v288 = vunpack.c.l.b16 %v85
    %v289 = vunpack.c.l.b16 %v86
    %v290 = vunpack.c.l.b16 %v87
    %v291 = vunpack.c.l.b16 %v88
    %v292 = vunpack.c.l.b16 %v89
    %v293 = vunpack.c.l.b16 %v90
    %v294 = vunpack.c.l.b16 %v91
    %v295 = vunpack.c.l.b16 %v92
    %v296 = vunpack.c.l.b16 %v93
    %v297 = vunpack.c.l.b16 %v94
    %v298 = vunpack.c.l.b16 %v95
    %v299 = vunpack.c.l.b16 %v96
    %v300 = vunpack.c.l.b16 %v97
    %v301 = vunpack.c.l.b16 %v98
    %v302 = vunpack.c.l.b16 %v99
    %v303 = vunpack.c.l.b16 %v100
    %v304 = vunpack.c.l.b16 %v101
    %v305 = vunpack.c.l.b16 %v102
    %v306 = vunpack.c.l.b16 %v103
    %v307 = vunpack.c.l.b16 %v104
    %v308 = vunpack.c.l.b16 %v105
    %v309 = vunpack.c.l.b16 %v106
    %v310 = vunpack.c.l.b16 %v107
    %v311 = vunpack.c.l.b16 %v108
    %v312 = vunpack.c.l.b16 %v109
    %v313 = vunpack.c.l.b16 %v110
    %v314 = vunpack.c.l.b16 %v111
    %v315 = vunpack.c.l.b16 %v112
    %v316 = vunpack.c.l.b16 %v113
    %v317 = vunpack.c.l.b16 %v114
    %v318 = vunpack.c.l.b16 %v115
    %v319 = vunpack.c.l.b16 %v116
    %v320 = vunpack.c.l.b16 %v117
    %v321 = vunpack.c.l.b16 %v118
    %v322 = vunpack.c.l.b16 %v119
    %v323 = vunpack.c.l.b16 %v120
    %v324 = vunpack.c.l.b16 %v121
    %v325 = vunpack.c.l.b16 %v122
    %v326 = vunpack.c.l.b16 %v123
    %v327 = vunpack.c.l.b16 %v124
    %v328 = vunpack.c.l.b16 %v125
    %v329 = vunpack.c.l.b16 %v126
    %v330 = vunpack.c.l.b16 %v127
    %v331 = vunpack.c.l.b16 %v128
    %v332 = vunpack.c.l.b16 %v129
    %v333 = vunpack.c.l.b16 %v130
    %v334 = vunpack.c.l.b16 %v131
    %v335 = vunpack.c.l.b16 %v132
    %v336 = vunpack.c.l.b16 %v133
    %v337 = vunpack.c.l.b16 %v134
    %v338 = vunpack.c.l.b16 %v135
    %v339 = vunpack.c.l.b16 %v136
    %v340 = vunpack.c.l.b16 %v137
    %v341 = vunpack.c.l.b16 %v138
    %v342 = vunpack.c.l.b16 %v139
    %v343 = vunpack.c.l.b16 %v140
    %v344 = vunpack.c.l.b16 %v141
    %v345 = vunpack.c.l.b16 %v142
    %v346 = vunpack.c.l.b16 %v143
    %v347 = vunpack.c.l.b16 %v144
    %v348 = vunpack.c.l.b16 %v145
    %v349 = vunpack.c.l.b16 %v146
    %v350 = vunpack.c.l.b16 %v147
    %v351 = vpack.c.b16 %v254, %v253
    %v352 = vpack.c.b16 %v256, %v255
    %v353 = vpack.c.b16 %v258, %v257
    %v354 = vpack.c.b16 %v260, %v259
    %v355 = vpack.c.b16 %v262, %v261
    %v356 = vpack.c.b16 %v264, %v263
    %v357 = vpack.c.b16 %v266, %v265
    %v358 = vpack.c.b16 %v268, %v267
    %v359 = vpack.c.b16 %v270, %v269
    %v360 = vpack.c.b16 %v272, %v271
    %v361 = vpack.c.b16 %v274, %v273
    %v362 = vpack.c.b16 %v276, %v275
    %v363 = vpack.c.b16 %v278, %v277
    %v364 = vpack.c.b16 %v280, %v279
    %v365 = vpack.c.b16 %v282, %v281
    %v366 = vpack.c.b16 %v284, %v283
    %v367 = vpack.c.b16 %v286, %v285
    %v368 = vpack.c.b16 %v288, %v287
    %v369 = vpack.c.b16 %v290, %v289
    %v370 = vpack.c.b16 %v292, %v291
    %v371 = vpack.c.b16 %v294, %v293
    %v372 = vpack.c.b16 %v296, %v295
    %v373 = vpack.c.b16 %v298, %v297
    %v374 = vpack.c.b16 %v300, %v299
    %v375 = vpack.c.b16 %v302, %v301
    %v376 = vpack.c.b16 %v304, %v303
    %v377 = vpack.c.b16 %v306, %v305
    %v378 = vpack.c.b16 %v308, %v307
    %v379 = vpack.c.b16 %v310, %v309
    %v380 = vpack.c.b16 %v312, %v311
    %v381 = vpack.c.b16 %v314, %v313
    %v382 = vpack.c.b16 %v316, %v315
    %v383 = vpack.c.b16 %v318, %v317
    %v384 = vpack.c.b16 %v320, %v319
    %v385 = vpack.c.b16 %v322, %v321
    %v386 = vpack.c.b16 %v324, %v323
    %v387 = vpack.c.b16 %v326, %v325
    %v388 = vpack.c.b16 %v328, %v327
    %v389 = vpack.c.b16 %v330, %v329
    %v390 = vpack.c.b16 %v332, %v331
    %v391 = vpack.c.b16 %v334, %v333
    %v392 = vpack.c.b16 %v336, %v335
    %v393 = vpack.c.b16 %v338, %v337
    %v394 = vpack.c.b16 %v340, %v339
    %v395 = vpack.c.b16 %v342, %v341
    %v396 = vpack.c.b16 %v344, %v343
    %v397 = vpack.c.b16 %v346, %v345
    %v398 = vpack.c.b16 %v348, %v347
    %v399 = vpack.c.b16 %v350, %v349
    %vm449 = vcmask 130048
    %v451 = vsel %vm449, %v49, 0
    %453 = vmatprep.subr.bf16.mxu0 0
    %454 = vmatpush1.bf16.msra.mxu0 %v351
    %455 = vmatprep.subr.bf16.mxu0 0
    %456 = vmatpush1.bf16.msra.mxu0 %v352
    %457 = vmatprep.subr.bf16.mxu0 0
    %458 = vmatpush1.bf16.msra.mxu0 %v353
    %459 = vmatprep.subr.bf16.mxu0 0
    %460 = vmatpush1.bf16.msra.mxu0 %v354
    %461 = vmatprep.subr.bf16.mxu0 0
    %462 = vmatpush1.bf16.msra.mxu0 %v355
    %463 = vmatprep.subr.bf16.mxu0 0
    %464 = vmatpush1.bf16.msra.mxu0 %v356
    %465 = vmatprep.subr.bf16.mxu0 0
    %466 = vmatpush1.bf16.msra.mxu0 %v357
    %467 = vmatprep.subr.bf16.mxu0 0
    %468 = vmatpush1.bf16.msra.mxu0 %v358
    %469 = vmatprep.subr.bf16.mxu0 0
    %470 = vmatpush1.bf16.msra.mxu0 %v359
    %471 = vmatprep.subr.bf16.mxu0 0
    %472 = vmatpush1.bf16.msra.mxu0 %v360
    %473 = vmatprep.subr.bf16.mxu0 0
    %474 = vmatpush1.bf16.msra.mxu0 %v361
    %475 = vmatprep.subr.bf16.mxu0 0
    %476 = vmatpush1.bf16.msra.mxu0 %v362
    %477 = vmatprep.subr.bf16.mxu0 0
    %478 = vmatpush1.bf16.msra.mxu0 %v363
    %479 = vmatprep.subr.bf16.mxu0 0
    %480 = vmatpush1.bf16.msra.mxu0 %v364
    %481 = vmatprep.subr.bf16.mxu0 0
    %482 = vmatpush1.bf16.msra.mxu0 %v365
    %483 = vmatprep.subr.bf16.mxu0 0
    %484 = vmatpush1.bf16.msra.mxu0 %v366
    %485 = vmatprep.mubr.bf16.mxu0 %v44
    %486 = vmatmul.mubr.bf16.gmra.mrb[0].mxu0 %v43
    %v487 = vpop.f32.mrb[0].mxu0
    %v488 = vadd.f32 %v153, %v487
    %v489 = vpop.f32.mrb[0].mxu0
    %v490 = vpop.f32.mrb[0].mxu0
    %v491 = vpop.f32.mrb[0].mxu0
    %492 = vdwg.mxu0
    %493 = vmatprep.subr.bf16.mxu0 0
    %494 = vmatpush1.bf16.msra.mxu0 %v367
    %495 = vmatprep.subr.bf16.mxu0 0
    %496 = vmatpush1.bf16.msra.mxu0 %v368
    %497 = vmatprep.subr.bf16.mxu0 0
    %498 = vmatpush1.bf16.msra.mxu0 %v369
    %499 = vmatprep.subr.bf16.mxu0 0
    %500 = vmatpush1.bf16.msra.mxu0 %v370
    %501 = vmatprep.subr.bf16.mxu0 0
    %502 = vmatpush1.bf16.msra.mxu0 %v371
    %503 = vmatprep.subr.bf16.mxu0 0
    %504 = vmatpush1.bf16.msra.mxu0 %v372
    %505 = vmatprep.subr.bf16.mxu0 0
    %506 = vmatpush1.bf16.msra.mxu0 %v373
    %507 = vmatprep.subr.bf16.mxu0 0
    %508 = vmatpush1.bf16.msra.mxu0 %v374
    %509 = vmatprep.subr.bf16.mxu0 0
    %510 = vmatpush1.bf16.msra.mxu0 %v375
    %511 = vmatprep.subr.bf16.mxu0 0
    %512 = vmatpush1.bf16.msra.mxu0 %v376
    %513 = vmatprep.subr.bf16.mxu0 0
    %514 = vmatpush1.bf16.msra.mxu0 %v377
    %515 = vmatprep.subr.bf16.mxu0 0
    %516 = vmatpush1.bf16.msra.mxu0 %v378
    %517 = vmatprep.subr.bf16.mxu0 0
    %518 = vmatpush1.bf16.msra.mxu0 %v379
    %519 = vmatprep.subr.bf16.mxu0 0
    %520 = vmatpush1.bf16.msra.mxu0 %v380
    %521 = vmatprep.subr.bf16.mxu0 0
    %522 = vmatpush1.bf16.msra.mxu0 %v381
    %523 = vmatprep.subr.bf16.mxu0 0
    %524 = vmatpush1.bf16.msra.mxu0 %v382
    %525 = vmatprep.mubr.bf16.mxu0 %v46
    %526 = vmatmul.mubr.bf16.gmra.mrb[0].mxu0 %v45
    %v527 = vpop.f32.mrb[0].mxu0
    %v528 = vadd.f32 %v488, %v527
    %v529 = vpop.f32.mrb[0].mxu0
    %v530 = vpop.f32.mrb[0].mxu0
    %v531 = vpop.f32.mrb[0].mxu0
    %532 = vdwg.mxu0
    %533 = vmatprep.subr.bf16.mxu0 0
    %534 = vmatpush1.bf16.msra.mxu0 %v383
    %535 = vmatprep.subr.bf16.mxu0 0
    %536 = vmatpush1.bf16.msra.mxu0 %v384
    %537 = vmatprep.subr.bf16.mxu0 0
    %538 = vmatpush1.bf16.msra.mxu0 %v385
    %539 = vmatprep.subr.bf16.mxu0 0
    %540 = vmatpush1.bf16.msra.mxu0 %v386
    %541 = vmatprep.subr.bf16.mxu0 0
    %542 = vmatpush1.bf16.msra.mxu0 %v387
    %543 = vmatprep.subr.bf16.mxu0 0
    %544 = vmatpush1.bf16.msra.mxu0 %v388
    %545 = vmatprep.subr.bf16.mxu0 0
    %546 = vmatpush1.bf16.msra.mxu0 %v389
    %547 = vmatprep.subr.bf16.mxu0 0
    %548 = vmatpush1.bf16.msra.mxu0 %v390
    %549 = vmatprep.subr.bf16.mxu0 0
    %550 = vmatpush1.bf16.msra.mxu0 %v391
    %551 = vmatprep.subr.bf16.mxu0 0
    %552 = vmatpush1.bf16.msra.mxu0 %v392
    %553 = vmatprep.subr.bf16.mxu0 0
    %554 = vmatpush1.bf16.msra.mxu0 %v393
    %555 = vmatprep.subr.bf16.mxu0 0
    %556 = vmatpush1.bf16.msra.mxu0 %v394
    %557 = vmatprep.subr.bf16.mxu0 0
    %558 = vmatpush1.bf16.msra.mxu0 %v395
    %559 = vmatprep.subr.bf16.mxu0 0
    %560 = vmatpush1.bf16.msra.mxu0 %v396
    %561 = vmatprep.subr.bf16.mxu0 0
    %562 = vmatpush1.bf16.msra.mxu0 %v397
    %563 = vmatprep.subr.bf16.mxu0 0
    %564 = vmatpush1.bf16.msra.mxu0 %v398
    %565 = vmatprep.mubr.bf16.mxu0 %v48
    %566 = vmatmul.mubr.bf16.gmra.mrb[0].mxu0 %v47
    %v567 = vpop.f32.mrb[0].mxu0
    %v568 = vadd.f32 %v528, %v567
    %v569 = vpop.f32.mrb[0].mxu0
    %v570 = vpop.f32.mrb[0].mxu0
    %v571 = vpop.f32.mrb[0].mxu0
    %572 = vdwg.mxu0
    %573 = vmatprep.subr.bf16.mxu0 0
    %574 = vmatpush1.bf16.msra.mxu0 %v399
    %575 = vmatprep.subr.bf16.mxu0 0
    %576 = vmatpush1.bf16.msra.mxu0 0
    %577 = vmatprep.subr.bf16.mxu0 0
    %578 = vmatpush1.bf16.msra.mxu0 0
    %579 = vmatprep.subr.bf16.mxu0 0
    %580 = vmatpush1.bf16.msra.mxu0 0
    %581 = vmatprep.subr.bf16.mxu0 0
    %582 = vmatpush1.bf16.msra.mxu0 0
    %583 = vmatprep.subr.bf16.mxu0 0
    %584 = vmatpush1.bf16.msra.mxu0 0
    %585 = vmatprep.subr.bf16.mxu0 0
    %586 = vmatpush1.bf16.msra.mxu0 0
    %587 = vmatprep.subr.bf16.mxu0 0
    %588 = vmatpush1.bf16.msra.mxu0 0
    %589 = vmatprep.subr.bf16.mxu0 0
    %590 = vmatpush1.bf16.msra.mxu0 0
    %591 = vmatprep.subr.bf16.mxu0 0
    %592 = vmatpush1.bf16.msra.mxu0 0
    %593 = vmatprep.subr.bf16.mxu0 0
    %594 = vmatpush1.bf16.msra.mxu0 0
    %595 = vmatprep.subr.bf16.mxu0 0
    %596 = vmatpush1.bf16.msra.mxu0 0
    %597 = vmatprep.subr.bf16.mxu0 0
    %598 = vmatpush1.bf16.msra.mxu0 0
    %599 = vmatprep.subr.bf16.mxu0 0
    %600 = vmatpush1.bf16.msra.mxu0 0
    %601 = vmatprep.subr.bf16.mxu0 0
    %602 = vmatpush1.bf16.msra.mxu0 0
    %603 = vmatprep.subr.bf16.mxu0 0
    %604 = vmatpush1.bf16.msra.mxu0 0
    %605 = vmatprep.mubr.bf16.mxu0 0
    %606 = vmatmul.mubr.bf16.gmra.mrb[0].mxu0 %v451
    %v607 = vpop.f32.mrb[0].mxu0
    %v608 = vadd.f32 %v568, %v607
    %v609 = vpop.f32.mrb[0].mxu0
    %v610 = vpop.f32.mrb[0].mxu0
    %v611 = vpop.f32.mrb[0].mxu0
    %612 = vdwg.mxu0
    %v613 = vmax.f32 %v608, 0.0
    %v614 = vld [vmem:[%s3] sm:$0xff]
    %v615 = vld [vmem:[%s3 + $0x8] sm:$0xff]
    %v616 = vld [vmem:[%s3 + $0x10] sm:$0xff]
    %v617 = vld [vmem:[%s3 + $0x18] sm:$0xff]
    %v618 = vld [vmem:[%s3 + $0x20] sm:$0xff]
    %v619 = vld [vmem:[%s3 + $0x28] sm:$0xff]
    %v620 = vld [vmem:[%s3 + $0x30] sm:$0xff]
    %v621 = vld [vmem:[%s3 + $0x38] sm:$0xff]
    %v622 = vld [vmem:[%s3 + $0x40] sm:$0xff]
    %v623 = vld [vmem:[%s3 + $0x48] sm:$0xff]
    %v624 = vld [vmem:[%s3 + $0x50] sm:$0xff]
    %v625 = vld [vmem:[%s3 + $0x58] sm:$0xff]
    %v626 = vld [vmem:[%s3 + $0x60] sm:$0xff]
    %v627 = vld [vmem:[%s3 + $0x68] sm:$0xff]
    %v628 = vld [vmem:[%s3 + $0x70] sm:$0xff]
    %v629 = vld [vmem:[%s3 + $0x78] sm:$0xff]
    %v630 = vld [vmem:[%s4] sm:$0x1]
    %v632 = vlaneseq
    %v633 = vshrl.u32 %v632, 7
    %v634 = vsub.s32 0, %v633
    %v635 = vrot.slane %v630, %v634
    %637 = vmatprep.subr.mxu0 0.0
    %638 = vmatpush1.msra.mxu0 %v614
    %639 = vmatprep.subr.mxu0 0.0
    %640 = vmatpush1.msra.mxu0 %v615
    %641 = vmatprep.subr.mxu0 0.0
    %642 = vmatpush1.msra.mxu0 %v616
    %643 = vmatprep.subr.mxu0 0.0
    %644 = vmatpush1.msra.mxu0 %v617
    %645 = vmatprep.subr.mxu0 0.0
    %646 = vmatpush1.msra.mxu0 %v618
    %647 = vmatprep.subr.mxu0 0.0
    %648 = vmatpush1.msra.mxu0 %v619
    %649 = vmatprep.subr.mxu0 0.0
    %650 = vmatpush1.msra.mxu0 %v620
    %651 = vmatprep.subr.mxu0 0.0
    %652 = vmatpush1.msra.mxu0 %v621
    %653 = vmatprep.subr.mxu0 0.0
    %654 = vmatpush1.msra.mxu0 %v622
    %655 = vmatprep.subr.mxu0 0.0
    %656 = vmatpush1.msra.mxu0 %v623
    %657 = vmatprep.subr.mxu0 0.0
    %658 = vmatpush1.msra.mxu0 %v624
    %659 = vmatprep.subr.mxu0 0.0
    %660 = vmatpush1.msra.mxu0 %v625
    %661 = vmatprep.subr.mxu0 0.0
    %662 = vmatpush1.msra.mxu0 %v626
    %663 = vmatprep.subr.mxu0 0.0
    %664 = vmatpush1.msra.mxu0 %v627
    %665 = vmatprep.subr.mxu0 0.0
    %666 = vmatpush1.msra.mxu0 %v628
    %667 = vmatprep.subr.mxu0 0.0
    %668 = vmatpush1.msra.mxu0 %v629
    %669 = vmatprep.subr.mxu0 0.0
    %670 = vmatpush1.msra.mxu0 0.0
    %671 = vmatprep.subr.mxu0 0.0
    %672 = vmatpush1.msra.mxu0 0.0
    %673 = vmatprep.subr.mxu0 0.0
    %674 = vmatpush1.msra.mxu0 0.0
    %675 = vmatprep.subr.mxu0 0.0
    %676 = vmatpush1.msra.mxu0 0.0
    %677 = vmatprep.subr.mxu0 0.0
    %678 = vmatpush1.msra.mxu0 0.0
    %679 = vmatprep.subr.mxu0 0.0
    %680 = vmatpush1.msra.mxu0 0.0
    %681 = vmatprep.subr.mxu0 0.0
    %682 = vmatpush1.msra.mxu0 0.0
    %683 = vmatprep.subr.mxu0 0.0
    %684 = vmatpush1.msra.mxu0 0.0
    %685 = vmatprep.subr.mxu0 0.0
    %686 = vmatpush1.msra.mxu0 0.0
    %687 = vmatprep.subr.mxu0 0.0
    %688 = vmatpush1.msra.mxu0 0.0
    %689 = vmatprep.subr.mxu0 0.0
    %690 = vmatpush1.msra.mxu0 0.0
    %691 = vmatprep.subr.mxu0 0.0
    %692 = vmatpush1.msra.mxu0 0.0
    %693 = vmatprep.subr.mxu0 0.0
    %694 = vmatpush1.msra.mxu0 0.0
    %695 = vmatprep.subr.mxu0 0.0
    %696 = vmatpush1.msra.mxu0 0.0
    %697 = vmatprep.subr.mxu0 0.0
    %698 = vmatpush1.msra.mxu0 0.0
    %699 = vmatprep.subr.mxu0 0.0
    %700 = vmatpush1.msra.mxu0 0.0
    %701 = vmatprep.mubr.f32.mxu0 0.0
    %702 = vmatmul.mubr.f32.gmra.mrb[0].mxu0 %v613
    %v703 = vpop.f32.mrb[0].mxu0
    %v704 = vadd.f32 %v635, %v703
    %v705 = vpop.f32.mrb[0].mxu0
    %706 = vdwg.mxu0
    %vm707 = vcmask 80896
    %708 = vst.msk [vmem:[#allocation5] sm:$0xff] %vm707, %v704
    // Predicated region
    $region26: #{tpu_custom_call.1} parent=1 // pred_check
      _
    $region27: #{tpu_custom_call.1} parent=1 // pred_check_branch
      %710 = sbr.rel (0) target = $region29
    $region28: #{tpu_custom_call.1} parent=1 // pred_region
      %s712 = ssub.s32 128, 128
      %713 = vsyncadd [#allocation4], %s712
      %s715 = sshll.u32 [#allocation5], 4
      %s716 = int_to_ptr.vmem [resolvable:$true] %s715
      %718 = dma.vmem_to_hbm [thread:$0]  %s716, 128, %s5, [#allocation4]
    $region29: #{tpu_custom_call.1} parent=1 // pred_fallthru
      _
    // Predicated region
    $region30: #{tpu_custom_call.1} parent=1 // pred_check
      _
    $region31: #{tpu_custom_call.1} parent=1 // pred_check_branch
      %720 = sbr.rel (0) target = $region33
    $region32: #{tpu_custom_call.1} parent=1 // pred_region
      %721 = dma.done [#allocation4], 128
    $region33: #{tpu_custom_call.1} parent=1 // pred_fallthru
      _
    %722 = vsyncpa [#allocation3], 1
    %723 = vsyncpa [#allocation4], 1

</llo_original>
